<compile_context>
chip_gen: v6e
topology: v6e:2x2x1
jax: 0.10.0
libtpu: 0.0.40
codegen_flags: <defaults>
</compile_context>

<pallas_src>
import functools

import jax
import jax.numpy as jnp
from jax.experimental import pallas as pl
from jax.experimental.pallas import tpu as pltpu


# ----------------------------------------------------------------------------
# Global tuning knobs
# ----------------------------------------------------------------------------

try:
    _KIND = jax.devices()[0].device_kind.lower()
except Exception:  # pragma: no cover
    _KIND = ""
# v5e: 4x128x128 MXU -> TN=128; v6e/v7x: 2x256x256 MXU -> TN=256.
_TN_MAX = 128 if "v5" in _KIND else 256
_TM_MAX = 256
_VMEM_LIMIT = 48 * 1024 * 1024  # explicit scoped-VMEM cap; safe on v5e/v6e/v7x.

_TAPS_ENABLED = True  # runtime fallback switch for the tap-conv path.


def _round_up(x, m):
    return (x + m - 1) // m * m


def _pick_tn(np_cols):
    tn = min(_TN_MAX, np_cols)
    if np_cols % tn != 0:
        tn = 128
    return tn


# ----------------------------------------------------------------------------
# Pallas kernels
# ----------------------------------------------------------------------------

def _mm_kernel(x_ref, w_ref, sb_ref, o_ref, *, relu):
    # y = act((x @ w) * scale + shift); matmul in bf16, accumulate/epilogue in f32.
    acc = jnp.dot(x_ref[...], w_ref[...], preferred_element_type=jnp.float32)
    y = acc * sb_ref[0:1, :] + sb_ref[1:2, :]
    if relu:
        y = jnp.maximum(y, 0.0)
    o_ref[...] = y.astype(o_ref.dtype)


def _mm_res_kernel(x_ref, w_ref, sb_ref, r_ref, o_ref, *, relu):
    # Same as above but with the residual branch fused into the epilogue.
    acc = jnp.dot(x_ref[...], w_ref[...], preferred_element_type=jnp.float32)
    y = acc * sb_ref[0:1, :] + sb_ref[1:2, :] + r_ref[...].astype(jnp.float32)
    if relu:
        y = jnp.maximum(y, 0.0)
    o_ref[...] = y.astype(o_ref.dtype)


def _conv_tap_kernel(x_ref, w_ref, sb_ref, o_ref, *, offs, cin, rows, relu):
    # KxK conv as a sum of kh*kw shifted matmuls over the flattened padded
    # activation that stays resident in VMEM (no HBM im2col).
    acc = jnp.dot(x_ref[offs[0]:offs[0] + rows, :], w_ref[0:cin, :],
                  preferred_element_type=jnp.float32)
    for t in range(1, len(offs)):
        off = offs[t]
        acc = acc + jnp.dot(x_ref[off:off + rows, :],
                            w_ref[t * cin:(t + 1) * cin, :],
                            preferred_element_type=jnp.float32)
    y = acc * sb_ref[0:1, :] + sb_ref[1:2, :]
    if relu:
        y = jnp.maximum(y, 0.0)
    o_ref[...] = y.astype(o_ref.dtype)


def _maxpool_tap_kernel(x_ref, o_ref, *, offs, rows):
    # 3x3 max pool via 9 shifted slices (f32 compare for v5e-safety).
    r = x_ref[offs[0]:offs[0] + rows, :].astype(jnp.float32)
    for off in offs[1:]:
        r = jnp.maximum(r, x_ref[off:off + rows, :].astype(jnp.float32))
    o_ref[...] = r.astype(o_ref.dtype)


def _head_kernel(x_ref, w1_ref, s1_ref, w2_ref, s2_ref, w3_ref, s3_ref, o_ref):
    # Fused: global average pool + Linear(2048,512)+ReLU + Linear(512,128)+ReLU
    #        + Linear(128,num_class).
    xm = jnp.mean(x_ref[...].astype(jnp.float32), axis=1)          # [N, C]
    h = jnp.dot(xm.astype(jnp.bfloat16), w1_ref[...],
                preferred_element_type=jnp.float32)
    h = jnp.maximum(h * s1_ref[0:1, :] + s1_ref[1:2, :], 0.0)
    h = jnp.dot(h.astype(jnp.bfloat16), w2_ref[...],
                preferred_element_type=jnp.float32)
    h = jnp.maximum(h * s2_ref[0:1, :] + s2_ref[1:2, :], 0.0)
    h = jnp.dot(h.astype(jnp.bfloat16), w3_ref[...],
                preferred_element_type=jnp.float32)
    o_ref[...] = h * s3_ref[0:1, :] + s3_ref[1:2, :]


# ----------------------------------------------------------------------------
# Kernel wrappers
# ----------------------------------------------------------------------------

def fused_matmul(x, wm, sb, relu, res=None, out_cols=None):
    """act((x @ wm) * scale + shift [+ res]).  x:[M,K] bf16, wm:[K,Np] bf16, sb:[2,Np] f32."""
    M, K = x.shape
    Kw, Np = wm.shape
    assert K == Kw, (K, Kw)
    TN = _pick_tn(Np)
    TM = min(_TM_MAX, _round_up(M, 16))
    Mp = _round_up(M, TM)
    xp = jnp.pad(x, ((0, Mp - M), (0, 0))) if Mp != M else x

    args = [xp, wm, sb]
    in_specs = [
        pl.BlockSpec((TM, K), lambda i, j: (i, 0)),
        pl.BlockSpec((K, TN), lambda i, j: (0, j)),
        pl.BlockSpec((2, TN), lambda i, j: (0, j)),
    ]
    if res is None:
        kernel = functools.partial(_mm_kernel, relu=relu)
    else:
        assert res.shape == (M, Np), (res.shape, M, Np)
        rp = jnp.pad(res, ((0, Mp - M), (0, 0))) if Mp != M else res
        args.append(rp)
        in_specs.append(pl.BlockSpec((TM, TN), lambda i, j: (i, j)))
        kernel = functools.partial(_mm_res_kernel, relu=relu)

    out = pl.pallas_call(
        kernel,
        out_shape=jax.ShapeDtypeStruct((Mp, Np), jnp.bfloat16),
        grid_spec=pltpu.PrefetchScalarGridSpec(
            num_scalar_prefetch=0,
            grid=(Mp // TM, Np // TN),
            in_specs=in_specs,
            out_specs=pl.BlockSpec((TM, TN), lambda i, j: (i, j)),
        ),
        compiler_params=pltpu.CompilerParams(
            dimension_semantics=("parallel", "parallel"),
            vmem_limit_bytes=_VMEM_LIMIT,
        ),
        cost_estimate=pl.CostEstimate(
            flops=2 * Mp * K * Np,
            transcendentals=0,
            bytes_accessed=2 * (Mp * K + K * Np + Mp * Np),
        ),
    )(*args)
    nc = Np if out_cols is None else out_cols
    return out[:M, :nc]


def conv1x1_bn(x, p, stride, relu, res=None):
    """1x1 conv + BN (+ReLU, + optional fused residual) with no im2col."""
    if stride > 1:
        x = x[:, ::stride, ::stride, :]
    N, H, W, C = x.shape
    xm = x.reshape(N * H * W, C)
    y = fused_matmul(xm, p["wm"], p["sb"], relu=relu, res=res, out_cols=p["cout"])
    return y.reshape(N, H, W, p["cout"])


def conv_bn_taps(x, p, stride, pad, relu):
    """KxK conv + BN (+ReLU) via in-kernel shifted-slice accumulation (no im2col)."""
    kh, kw, cin, cout = p["kh"], p["kw"], p["cin"], p["cout"]
    N, H, W, C = x.shape
    assert C == cin
    if pad > 0:
        x = jnp.pad(x, ((0, 0), (pad, pad), (pad, pad), (0, 0)))
    Hp, Wp = H + 2 * pad, W + 2 * pad
    oh = (Hp - kh) // stride + 1
    ow = (Wp - kw) // stride + 1

    L = N * Hp * Wp
    L8 = _round_up(L, 16)
    max_off = (kh - 1) * Wp + (kw - 1)
    Mp = _round_up(L8 + max_off, 16)
    xf = jnp.pad(x.reshape(L, cin), ((0, Mp - L), (0, 0)))
    offs = tuple(i * Wp + j for i in range(kh) for j in range(kw))

    Np = p["wm"].shape[1]
    TN = _pick_tn(Np)
    kernel = functools.partial(_conv_tap_kernel, offs=offs, cin=cin, rows=L8, relu=relu)
    out = pl.pallas_call(
        kernel,
        out_shape=jax.ShapeDtypeStruct((L8, Np), jnp.bfloat16),
        grid_spec=pltpu.PrefetchScalarGridSpec(
            num_scalar_prefetch=0,
            grid=(Np // TN,),
            in_specs=[
                pl.BlockSpec((Mp, cin), lambda j: (0, 0)),
                pl.BlockSpec((kh * kw * cin, TN), lambda j: (0, j)),
                pl.BlockSpec((2, TN), lambda j: (0, j)),
            ],
            out_specs=pl.BlockSpec((L8, TN), lambda j: (0, j)),
        ),
        compiler_params=pltpu.CompilerParams(
            dimension_semantics=("parallel",),
            vmem_limit_bytes=_VMEM_LIMIT,
        ),
        cost_estimate=pl.CostEstimate(
            flops=2 * L8 * kh * kw * cin * Np,
            transcendentals=0,
            bytes_accessed=2 * (Mp * cin + kh * kw * cin * Np + L8 * Np),
        ),
    )(xf, p["wm"], p["sb"])
    y = out[:L].reshape(N, Hp, Wp, Np)
    y = y[:, 0:stride * (oh - 1) + 1:stride, 0:stride * (ow - 1) + 1:stride, :cout]
    return y


def extract_patches(x, kh, kw, stride, pad):
    """Only used for the tiny 7x7/Cin=3 stem. x:[N,H,W,C] -> [N,OH,OW,kh*kw,C]."""
    N, H, W, C = x.shape
    if pad > 0:
        x = jnp.pad(x, ((0, 0), (pad, pad), (pad, pad), (0, 0)))
    Hp, Wp = H + 2 * pad, W + 2 * pad
    oh = (Hp - kh) // stride + 1
    ow = (Wp - kw) // stride + 1
    slices = []
    for i in range(kh):
        for j in range(kw):
            slices.append(x[:, i:i + stride * (oh - 1) + 1:stride,
                            j:j + stride * (ow - 1) + 1:stride, :])
    return jnp.stack(slices, axis=3), oh, ow


def conv_bn_im2col(x, p, stride, pad, relu):
    kh, kw, cin = p["kh"], p["kw"], p["cin"]
    N = x.shape[0]
    patches, oh, ow = extract_patches(x, kh, kw, stride, pad)
    xm = patches.reshape(N * oh * ow, kh * kw * cin)
    y = fused_matmul(xm, p["wm"], p["sb"], relu=relu, out_cols=p["cout"])
    return y.reshape(N, oh, ow, p["cout"])


def conv_bn_spatial(x, p, stride, pad, relu):
    """3x3 conv path; falls back to im2col if the tap kernel fails to lower."""
    global _TAPS_ENABLED
    if _TAPS_ENABLED:
        try:
            return conv_bn_taps(x, p, stride, pad, relu)
        except Exception:
            _TAPS_ENABLED = False
    return conv_bn_im2col(x, p, stride, pad, relu)


def maxpool_3x3_s2(x):
    """Max pool 3x3 / stride 2 / pad 1, shifted-slice kernel (no patch tensor)."""
    kh = kw = 3
    stride, pad = 2, 1
    N, H, W, C = x.shape
    xp = jnp.pad(x, ((0, 0), (pad, pad), (pad, pad), (0, 0)),
                 constant_values=-jnp.inf)
    Hp, Wp = H + 2 * pad, W + 2 * pad
    oh = (Hp - kh) // stride + 1
    ow = (Wp - kw) // stride + 1

    L = N * Hp * Wp
    L8 = _round_up(L, 16)
    max_off = (kh - 1) * Wp + (kw - 1)
    Mp = _round_up(L8 + max_off, 16)
    xf = jnp.pad(xp.reshape(L, C), ((0, Mp - L), (0, 0)))
    offs = tuple(i * Wp + j for i in range(kh) for j in range(kw))

    out = pl.pallas_call(
        functools.partial(_maxpool_tap_kernel, offs=offs, rows=L8),
        out_shape=jax.ShapeDtypeStruct((L8, C), x.dtype),
        grid=(1,),
        in_specs=[pl.BlockSpec((Mp, C), lambda i: (0, 0))],
        out_specs=pl.BlockSpec((L8, C), lambda i: (0, 0)),
        compiler_params=pltpu.CompilerParams(vmem_limit_bytes=_VMEM_LIMIT),
    )(xf)
    y = out[:L].reshape(N, Hp, Wp, C)
    return y[:, 0:stride * (oh - 1) + 1:stride, 0:stride * (ow - 1) + 1:stride, :]


def head_forward(x, fc_params, num_class):
    """Fused global average pool + (Linear,ReLU,Linear,ReLU,Linear) head."""
    N, H, W, C = x.shape
    HW = H * W
    xr = x.reshape(N, HW, C)
    Nr = _round_up(N, 8)
    if Nr != N:
        xr = jnp.pad(xr, ((0, Nr - N), (0, 0), (0, 0)))
    fc1, fc2, fc3 = fc_params
    np3 = fc3["wm"].shape[1]
    out = pl.pallas_call(
        _head_kernel,
        out_shape=jax.ShapeDtypeStruct((Nr, np3), jnp.float32),
        grid=(1,),
        in_specs=[
            pl.BlockSpec((Nr, HW, C), lambda i: (0, 0, 0)),
            pl.BlockSpec(fc1["wm"].shape, lambda i: (0, 0)),
            pl.BlockSpec(fc1["sb"].shape, lambda i: (0, 0)),
            pl.BlockSpec(fc2["wm"].shape, lambda i: (0, 0)),
            pl.BlockSpec(fc2["sb"].shape, lambda i: (0, 0)),
            pl.BlockSpec(fc3["wm"].shape, lambda i: (0, 0)),
            pl.BlockSpec(fc3["sb"].shape, lambda i: (0, 0)),
        ],
        out_specs=pl.BlockSpec((Nr, np3), lambda i: (0, 0)),
        compiler_params=pltpu.CompilerParams(vmem_limit_bytes=_VMEM_LIMIT),
    )(xr, fc1["wm"], fc1["sb"], fc2["wm"], fc2["sb"], fc3["wm"], fc3["sb"])
    return out[:N, :num_class]


# ----------------------------------------------------------------------------
# Parameter initialization (deterministic, synthetic, pre-packed for the kernels)
# ----------------------------------------------------------------------------

def _pack(w, scale, shift):
    kh, kw, cin, cout = w.shape
    np_cols = _round_up(cout, 128)
    wm = w.reshape(kh * kw * cin, cout)
    wm = jnp.pad(wm, ((0, 0), (0, np_cols - cout))).astype(jnp.bfloat16)
    sb = jnp.stack([scale, shift], axis=0).astype(jnp.float32)
    sb = jnp.pad(sb, ((0, 0), (0, np_cols - cout)))
    return {"wm": wm, "sb": sb, "kh": kh, "kw": kw, "cin": cin, "cout": cout}


def init_conv_bn(key, kh, kw, cin, cout):
    k1, k2, k3, k4, k5 = jax.random.split(key, 5)
    fan_in = kh * kw * cin
    w = jax.random.normal(k1, (kh, kw, cin, cout), jnp.float32) / jnp.sqrt(fan_in)
    gamma = jax.random.uniform(k2, (cout,), jnp.float32, 0.5, 1.0)
    beta = 0.05 * jax.random.normal(k3, (cout,), jnp.float32)
    rmean = 0.1 * jax.random.normal(k4, (cout,), jnp.float32)
    rvar = jax.random.uniform(k5, (cout,), jnp.float32, 0.8, 1.2)
    scale = gamma / jnp.sqrt(rvar + 1e-5)     # eval-mode BN folded
    shift = beta - rmean * scale
    return _pack(w, scale, shift)


def init_linear(key, din, dout):
    k1, k2 = jax.random.split(key)
    w = jax.random.normal(k1, (1, 1, din, dout), jnp.float32) / jnp.sqrt(din)
    b = 0.1 * jax.random.normal(k2, (dout,), jnp.float32)
    return _pack(w, jnp.ones((dout,), jnp.float32), b)


def init_bottleneck(key, inplanes, planes, stride, downsample):
    ks = jax.random.split(key, 4)
    p = {
        "conv1": init_conv_bn(ks[0], 1, 1, inplanes, planes),
        "conv2": init_conv_bn(ks[1], 3, 3, planes, planes),
        "conv3": init_conv_bn(ks[2], 1, 1, planes, planes * 4),
        "stride": stride,
    }
    if downsample:
        p["downsample"] = init_conv_bn(ks[3], 1, 1, inplanes, planes * 4)
    return p


def init_resnet152(key, num_class):
    blocks_per_layer = [3, 8, 36, 3]   # torchvision resnet152
    widths = [64, 128, 256, 512]
    keys = jax.random.split(key, 8)
    params = {"stem": init_conv_bn(keys[0], 7, 7, 3, 64), "num_class": num_class}
    inplanes = 64
    layers = []
    for li, (nb, w) in enumerate(zip(blocks_per_layer, widths)):
        first_stride = 1 if li == 0 else 2
        lkeys = jax.random.split(keys[1 + li], nb)
        blocks = []
        for bi in range(nb):
            s = first_stride if bi == 0 else 1
            blocks.append(init_bottleneck(lkeys[bi], inplanes, w, s,
                                          downsample=(bi == 0)))
            inplanes = w * 4
        layers.append(blocks)
    params["layers"] = layers
    fckeys = jax.random.split(keys[5], 3)
    params["fc"] = [
        init_linear(fckeys[0], 512 * 4, 512),   # nn.Linear(2048, 512)
        init_linear(fckeys[1], 512, 128),       # nn.Linear(512, 128)
        init_linear(fckeys[2], 128, num_class), # nn.Linear(128, num_class)
    ]
    return params


# ----------------------------------------------------------------------------
# Forward pass
# ----------------------------------------------------------------------------

def bottleneck_forward(x, p):
    stride = p["stride"]
    out = conv1x1_bn(x, p["conv1"], stride=1, relu=True)
    out = conv_bn_spatial(out, p["conv2"], stride=stride, pad=1, relu=True)
    if "downsample" in p:
        idn = conv1x1_bn(x, p["downsample"], stride=stride, relu=False)
    else:
        idn = x
    N, H, W, C = idn.shape
    res = idn.reshape(N * H * W, C)
    c3 = p["conv3"]
    xm = out.reshape(N * H * W, c3["cin"])
    # conv3 + BN + residual add + ReLU fused in one kernel.
    y = fused_matmul(xm, c3["wm"], c3["sb"], relu=True, res=res, out_cols=c3["cout"])
    return y.reshape(N, H, W, c3["cout"])


def resnet152_forward(params, x_nchw):
    # PyTorch passes NCHW; convert to NHWC bf16 for the TPU kernels.
    x = jnp.transpose(x_nchw, (0, 2, 3, 1)).astype(jnp.bfloat16)

    # Stem: 7x7/2 conv + BN + ReLU (Cin=3 -> im2col is tiny and MXU-friendlier
    # than 49 K=3 matmuls), then fused 3x3/2 max pool.
    x = conv_bn_im2col(x, params["stem"], stride=2, pad=3, relu=True)
    x = maxpool_3x3_s2(x)

    # Residual stages.
    for blocks in params["layers"]:
        for bp in blocks:
            x = bottleneck_forward(x, bp)

    # Fused global average pool + 3-layer FC head.
    return head_forward(x, params["fc"], params["num_class"])


# ----------------------------------------------------------------------------
# Main
# ----------------------------------------------------------------------------

if __name__ == "__main__":
    num_class = 10
    key = jax.random.PRNGKey(0)
    pkey, xkey = jax.random.split(key)

    params = init_resnet152(pkey, num_class)
    # Small RGB image batch consistent with the module (NCHW).
    x = jax.random.normal(xkey, (2, 3, 32, 32), jnp.float32)

    out = resnet152_forward(params, x)
    out = jax.block_until_ready(out)

    assert out.shape == (2, num_class), out.shape
    assert bool(jnp.all(jnp.isfinite(out)))
    print("KERNEL_OK")
</pallas_src>

<mosaic_0001>
module attributes {stable_mosaic.version = 11 : i64} {
  func.func @_mm_kernel(%arg0: i32, %arg1: i32, %arg2: memref<256x147xbf16, #tpu.memory_space<vmem>>, %arg3: memref<147x128xbf16, #tpu.memory_space<vmem>>, %arg4: memref<2x128xf32, #tpu.memory_space<vmem>>, %arg5: memref<256x128xbf16, #tpu.memory_space<vmem>>) attributes {dimension_semantics = [#tpu.dimension_semantics<parallel>, #tpu.dimension_semantics<parallel>], iteration_bounds = array<i64: 2, 1>, scalar_prefetch = 0 : i64, scratch_operands = 0 : i64, tpu.core_type = #tpu.core_type<tc>, window_params = [{transform_indices = @transform_0, window_bounds = array<i64: 256, 147>}, {transform_indices = @transform_1, window_bounds = array<i64: 147, 128>}, {transform_indices = @transform_2, window_bounds = array<i64: 2, 128>}, {transform_indices = @transform_3, window_bounds = array<i64: 256, 128>}]} {
    %c0 = arith.constant 0 : index
    %c0_0 = arith.constant 0 : index
    %0 = vector.load %arg2[%c0, %c0_0] : memref<256x147xbf16, #tpu.memory_space<vmem>>, vector<256x147xbf16>
    %c0_1 = arith.constant 0 : index
    %c0_2 = arith.constant 0 : index
    %1 = vector.load %arg3[%c0_1, %c0_2] : memref<147x128xbf16, #tpu.memory_space<vmem>>, vector<147x128xbf16>
    %cst = arith.constant dense<0.000000e+00> : vector<256x128xf32>
    %2 = tpu.matmul %0, %1, %cst {dimension_numbers = #tpu.dot_dimension_numbers<[1], [0], [0], [1], [0, 0, 1, 1], [], []>} : vector<256x147xbf16>, vector<147x128xbf16>, vector<256x128xf32> -> vector<256x128xf32>
    %c0_3 = arith.constant 0 : index
    %c0_4 = arith.constant 0 : index
    %3 = vector.load %arg4[%c0_3, %c0_4] : memref<2x128xf32, #tpu.memory_space<vmem>>, vector<1x128xf32>
    %4 = vector.broadcast %3 : vector<1x128xf32> to vector<256x128xf32>
    %5 = arith.mulf %2, %4 : vector<256x128xf32>
    %c1 = arith.constant 1 : index
    %c0_5 = arith.constant 0 : index
    %6 = vector.load %arg4[%c1, %c0_5] : memref<2x128xf32, #tpu.memory_space<vmem>>, vector<1x128xf32>
    %7 = vector.broadcast %6 : vector<1x128xf32> to vector<256x128xf32>
    %8 = arith.addf %5, %7 : vector<256x128xf32>
    %cst_6 = arith.constant 0.000000e+00 : f32
    %9 = vector.broadcast %cst_6 : f32 to vector<256x128xf32>
    %10 = arith.maximumf %8, %9 : vector<256x128xf32>
    %11 = arith.truncf %10 : vector<256x128xf32> to vector<256x128xbf16>
    %c0_7 = arith.constant 0 : index
    %c0_8 = arith.constant 0 : index
    %12 = vector.load %arg5[%c0_7, %c0_8] : memref<256x128xbf16, #tpu.memory_space<vmem>>, vector<256x128xbf16>
    tpu.vector_store %arg5[%c0_7, %c0_8], %11 {strides = array<i32>} : memref<256x128xbf16, #tpu.memory_space<vmem>>, vector<256x128xbf16>,
    return
  }
  func.func @transform_0(%arg0: i32, %arg1: i32) -> (i32, i32) {
    %c0_i32 = arith.constant 0 : i32
    %c0_i32_0 = arith.constant 0 : i32
    return %arg0, %c0_i32 : i32, i32
  }
  func.func @transform_1(%arg0: i32, %arg1: i32) -> (i32, i32) {
    %c0_i32 = arith.constant 0 : i32
    %c0_i32_0 = arith.constant 0 : i32
    return %c0_i32, %arg1 : i32, i32
  }
  func.func @transform_2(%arg0: i32, %arg1: i32) -> (i32, i32) {
    %c0_i32 = arith.constant 0 : i32
    %c0_i32_0 = arith.constant 0 : i32
    return %c0_i32, %arg1 : i32, i32
  }
  func.func @transform_3(%arg0: i32, %arg1: i32) -> (i32, i32) {
    %c0_i32 = arith.constant 0 : i32
    return %arg0, %arg1 : i32, i32
  }
}

</mosaic_0001>

<llo_original>
// kernel: tpu_custom_call.1
$region0: #{tpu_custom_call.1}
  #allocation0 [shape = 'u32[]', space=smem, size = 0x4, offset = 0x4, fixed_abs, tag = 'smem constant byte address 0x4 - core index']
  #allocation1 [shape = 'u32[144,128]{1,0:T(1,128)}', space=vmem, size = 0x12000, scoped, tag = 'internal scratch']
  %s0 = inlined_call_operand.vmem [shape: bf16[512,147], index: 0, kind: input, shape index: {}]
  %s1 = inlined_call_operand.vmem [shape: bf16[147,128], index: 1, kind: input, shape index: {}]
  %s2 = inlined_call_operand.vmem [shape: f32[2,128], index: 2, kind: input, shape index: {}]
  %s3 = inlined_call_operand.hbm [shape: bf16[512,128], index: 3, kind: output, shape index: {}]
  %s4 = sld [smem:[#allocation0]]
  $region45: #{tpu_custom_call.1} parent=0
    _
  %s6 = ssub.s32 1, %s4
  %s7 = scalar_select 0, %s6, %s4
  $region1: #{tpu_custom_call.1} parent=0
    #allocation2 [shape = 'u8[131072]{0}', space=vmem, size = 0x20000, scoped, tag = 'output window, operand 0']
    #allocation3 [shape = 's32[2]{0}', space=sflag, size = 0x8, scoped, tag = 'scoped memory for tpu_custom_call.1']
    %8 = vsyncpa [#allocation3], 0
    %s9 = scalar_lea.sflag [#allocation3], 1
    %10 = vsyncpa %s9, 0
    loop: start=0, step=1, limit=4
    $region2: #{tpu_custom_call.1} parent=1 // loop_pre_header
      _
    $region3: #{tpu_custom_call.1} parent=1 // loop_header
      %s12 = sphi 0, %s16
      %p13 = scmp.ge.s32.totalorder %s12, 4
      %s19 = sphi 0, %s31
      %s20 = sphi 0, %s27
      %s21 = sphi 0, %s19
      %s22 = sphi 0, %s20
      %s23 = sphi 0, %s21
      %s24 = sphi 0, %s22
      %s34 = sphi 0, %s36
      %s37 = sphi 0, %s34
      %s38 = sphi 0, %s37
      %s54 = sphi 0, %s38
      %s60 = sphi 0, %s62
      %s63 = sphi 0, %s60
      %s64 = sphi 0, %s63
      %s80 = sphi 0, %s64
      %s86 = sphi 0, %s88
      %s89 = sphi 0, %s86
      %s90 = sphi 0, %s89
      %s106 = sphi 0, %s90
      %s114 = sphi 0, %s116
      %s117 = sphi 0, %s114
      %s118 = sphi 0, %s117
      %s134 = sphi 0, %s118
    $region4: #{tpu_custom_call.1} parent=1 // loop_header_branch
      %15 = sbr.rel (%p13) target = $region8
    $region5: #{tpu_custom_call.1} parent=1 // loop_body
      %s17 = ssub.s32 %s12, 1
      %s18 = ssub.s32 %s12, 2
      %s25 = sadd.s32 1, %s20
      %p26 = scmp.ge.s32.totalorder %s25, 1
      %s27 = scalar_select %p26, 0, %s25
      %s28 = sadd.s32 1, %s19
      %s29 = scalar_select %p26, %s28, %s19
      %p30 = scmp.ge.s32.totalorder %s29, 2
      %s31 = scalar_select %p30, 0, %s29
      %s32 = ssub.s32 %s19, %s31
      %p33 = scmp.eq.s32.totalorder %s32, 0
      %s35 = sadd.s32 %s34, 1
      %s36 = scalar_select %p33, %s34, %s35
      %p39 = pneg %p33
      %p40 = scmp.eq.s32.totalorder %s12, 1
      %p41 = por %p39, %p40
      %p42 = scmp.ne.s32.totalorder %s34, %s37
      %p43 = scmp.eq.s32.totalorder %s12, 0
      %p44 = por %p42, %p43
      %p45 = scmp.ne.s32.totalorder %s34, %s37
      %p46 = scmp.eq.s32.totalorder %s17, 1
      %p47 = por %p45, %p46
      %p48 = scmp.ne.s32.totalorder %s37, %s38
      %p49 = scmp.eq.s32.totalorder %s17, 0
      %p50 = por %p48, %p49
      %p51 = scmp.ne.s32.totalorder %s37, %s38
      %p52 = scmp.eq.s32.totalorder %s18, 1
      %p53 = por %p51, %p52
      %p55 = scmp.ne.s32.totalorder %s38, %s54
      %p56 = scmp.eq.s32.totalorder %s18, 0
      %p57 = por %p55, %p56
      %s58 = ssub.s32 %s20, %s27
      %p59 = scmp.eq.s32.totalorder %s58, 0
      %s61 = sadd.s32 %s60, 1
      %s62 = scalar_select %p59, %s60, %s61
      %p65 = pneg %p59
      %p66 = scmp.eq.s32.totalorder %s12, 1
      %p67 = por %p65, %p66
      %p68 = scmp.ne.s32.totalorder %s60, %s63
      %p69 = scmp.eq.s32.totalorder %s12, 0
      %p70 = por %p68, %p69
      %p71 = scmp.ne.s32.totalorder %s60, %s63
      %p72 = scmp.eq.s32.totalorder %s17, 1
      %p73 = por %p71, %p72
      %p74 = scmp.ne.s32.totalorder %s63, %s64
      %p75 = scmp.eq.s32.totalorder %s17, 0
      %p76 = por %p74, %p75
      %p77 = scmp.ne.s32.totalorder %s63, %s64
      %p78 = scmp.eq.s32.totalorder %s18, 1
      %p79 = por %p77, %p78
      %p81 = scmp.ne.s32.totalorder %s64, %s80
      %p82 = scmp.eq.s32.totalorder %s18, 0
      %p83 = por %p81, %p82
      %s84 = ssub.s32 %s20, %s27
      %p85 = scmp.eq.s32.totalorder %s84, 0
      %s87 = sadd.s32 %s86, 1
      %s88 = scalar_select %p85, %s86, %s87
      %p91 = pneg %p85
      %p92 = scmp.eq.s32.totalorder %s12, 1
      %p93 = por %p91, %p92
      %p94 = scmp.ne.s32.totalorder %s86, %s89
      %p95 = scmp.eq.s32.totalorder %s12, 0
      %p96 = por %p94, %p95
      %p97 = scmp.ne.s32.totalorder %s86, %s89
      %p98 = scmp.eq.s32.totalorder %s17, 1
      %p99 = por %p97, %p98
      %p100 = scmp.ne.s32.totalorder %s89, %s90
      %p101 = scmp.eq.s32.totalorder %s17, 0
      %p102 = por %p100, %p101
      %p103 = scmp.ne.s32.totalorder %s89, %s90
      %p104 = scmp.eq.s32.totalorder %s18, 1
      %p105 = por %p103, %p104
      %p107 = scmp.ne.s32.totalorder %s90, %s106
      %p108 = scmp.eq.s32.totalorder %s18, 0
      %p109 = por %p107, %p108
      %s110 = ssub.s32 %s19, %s31
      %s111 = ssub.s32 %s20, %s27
      %s112 = sor.u32 %s110, %s111
      %p113 = scmp.eq.s32.totalorder %s112, 0
      %s115 = sadd.s32 %s114, 1
      %s116 = scalar_select %p113, %s114, %s115
      %p119 = pneg %p113
      %p120 = scmp.eq.s32.totalorder %s12, 1
      %p121 = por %p119, %p120
      %p122 = scmp.ne.s32.totalorder %s114, %s117
      %p123 = scmp.eq.s32.totalorder %s12, 0
      %p124 = por %p122, %p123
      %p125 = scmp.ne.s32.totalorder %s114, %s117
      %p126 = scmp.eq.s32.totalorder %s17, 1
      %p127 = por %p125, %p126
      %p128 = scmp.ne.s32.totalorder %s117, %s118
      %p129 = scmp.eq.s32.totalorder %s17, 0
      %p130 = por %p128, %p129
      %p131 = scmp.ne.s32.totalorder %s117, %s118
      %p132 = scmp.eq.s32.totalorder %s18, 1
      %p133 = por %p131, %p132
      %p135 = scmp.ne.s32.totalorder %s118, %s134
      %p136 = scmp.eq.s32.totalorder %s18, 0
      %p137 = por %p135, %p136
      %p138 = scmp.le.s32.totalorder 1, %s12
      %p139 = scmp.lt.s32.totalorder %s12, 3
      %p140 = pnand %p138, %p139
      %p141 = pneg %p140
      // Predicated region
      $region9: #{tpu_custom_call.1} parent=5 // pred_check
        _
      $region10: #{tpu_custom_call.1} parent=5 // pred_check_branch
        %143 = sbr.rel (%p140) target = $region12
      $region11: #{tpu_custom_call.1} parent=5 // pred_region
        %s144 = ssub.s32 %s12, 1
        // Predicated region
        $region13: #{tpu_custom_call.1} parent=11 // pred_check
          %p145 = pneg %p76
        $region14: #{tpu_custom_call.1} parent=11 // pred_check_branch
          %147 = sbr.rel (%p145) target = $region16
        $region15: #{tpu_custom_call.1} parent=11 // pred_region
          %p148 = scmp.lt.s32.totalorder %s22, 0
          %s149 = scalar_select %p148, %s22, 0
          %s150 = smul.addr %s149, 4
          %s151 = scalar_lea.vmem %s1, %s150
        $region16: #{tpu_custom_call.1} parent=11 // pred_fallthru
          _
        // Predicated region
        $region17: #{tpu_custom_call.1} parent=11 // pred_check
          %p152 = pneg %p102
        $region18: #{tpu_custom_call.1} parent=11 // pred_check_branch
          %154 = sbr.rel (%p152) target = $region20
        $region19: #{tpu_custom_call.1} parent=11 // pred_region
          %p155 = scmp.lt.s32.totalorder %s22, 0
          %s156 = scalar_select %p155, %s22, 0
          %s157 = smul.addr %s156, 2
          %s158 = scalar_lea.vmem %s2, %s157
        $region20: #{tpu_custom_call.1} parent=11 // pred_fallthru
          _
      $region12: #{tpu_custom_call.1} parent=5 // pred_fallthru
        _
      %p159 = scmp.lt.s32.totalorder %s12, 2
      // Predicated region
      $region21: #{tpu_custom_call.1} parent=5 // pred_check
        %p160 = pneg %p159
      $region22: #{tpu_custom_call.1} parent=5 // pred_check_branch
        %162 = sbr.rel (%p160) target = $region24
      $region23: #{tpu_custom_call.1} parent=5 // pred_region
        // Predicated region
        $region25: #{tpu_custom_call.1} parent=23 // pred_check
          %p163 = pneg %p44
        $region26: #{tpu_custom_call.1} parent=23 // pred_check_branch
          %165 = sbr.rel (%p163) target = $region28
        $region27: #{tpu_custom_call.1} parent=23 // pred_region
          %s166 = smul.u32 32, %s19
          %p167 = scmp.lt.s32.totalorder %s166, 63
          %s168 = scalar_select %p167, %s166, 63
          %s169 = smul.addr %s168, 2
          %s170 = smul.addr %s169, 4
          %s171 = scalar_lea.vmem %s0, %s170
          %s172 = smul.u32 32, %s19
        $region28: #{tpu_custom_call.1} parent=23 // pred_fallthru
          _
      $region24: #{tpu_custom_call.1} parent=5 // pred_fallthru
        _
      %p173 = scmp.le.s32.totalorder 1, %s12
      %p174 = scmp.lt.s32.totalorder %s12, 3
      %p175 = pnand %p173, %p174
      %p176 = pneg %p175
      // Predicated region
      $region29: #{tpu_custom_call.1} parent=5 // pred_check
        _
      $region30: #{tpu_custom_call.1} parent=5 // pred_check_branch
        %178 = sbr.rel (%p175) target = $region32
      $region31: #{tpu_custom_call.1} parent=5 // pred_region
        %s179 = ssub.s32 %s12, 1
        %s180 = smul.u32 32, %s21
        %p181 = scmp.lt.s32.totalorder %s180, 63
        %s182 = scalar_select %p181, %s180, 63
        %s183 = smul.addr %s182, 2
        %s184 = smul.addr %s183, 4
        %s185 = scalar_lea.vmem %s0, %s184
        %p186 = pneg %p50
        %p187 = pneg %p47
        %p188 = scmp.lt.s32.totalorder %s22, 0
        %s189 = scalar_select %p188, %s22, 0
        %s190 = smul.addr %s189, 4
        %s191 = scalar_lea.vmem %s1, %s190
        %p192 = pneg %p76
        %p193 = pneg %p73
        %p194 = scmp.lt.s32.totalorder %s22, 0
        %s195 = scalar_select %p194, %s22, 0
        %s196 = smul.addr %s195, 2
        %s197 = scalar_lea.vmem %s2, %s196
        %p198 = pneg %p102
        %p199 = pneg %p99
        %p200 = pneg %p130
        %p201 = pneg %p127
        %s202 = sand.u32 %s117, 1
        %s203 = scalar_lea.sflag [#allocation3], %s202
        %s204 = sand.u32 %s117, 1
        %s205 = smul.addr %s204, 128
        %s206 = scalar_lea.vmem [#allocation2], %s205
        %s207 = smul.u32 32, %s21
        %p208 = scmp.lt.s32.totalorder %s207, 63
        %s209 = scalar_select %p208, %s207, 63
        %s210 = smul.addr %s209, 2
        %s211 = smul.addr %s210, 4
        %s212 = scalar_lea.vmem %s0, %s211
        %s213 = smul.u32 32, %s21
        %p214 = scmp.lt.s32.totalorder %s22, 0
        %s215 = scalar_select %p214, %s22, 0
        %s216 = smul.addr %s215, 4
        %s217 = scalar_lea.vmem %s1, %s216
        %p218 = scmp.lt.s32.totalorder %s22, 0
        %s219 = scalar_select %p218, %s22, 0
        %s220 = smul.addr %s219, 2
        %s221 = scalar_lea.vmem %s2, %s220
        %s222 = smul.u32 32, %s21
        %v224 = vld [vmem:[%s212] sm:$0xff]
        %v225 = vld [vmem:[%s212 + $0x8] sm:$0xff]
        %v226 = vld [vmem:[%s212 + $0x10] sm:$0xff]
        %v227 = vld [vmem:[%s212 + $0x18] sm:$0xff]
        %v228 = vld [vmem:[%s212 + $0x20] sm:$0xff]
        %v229 = vld [vmem:[%s212 + $0x28] sm:$0xff]
        %v230 = vld [vmem:[%s212 + $0x30] sm:$0xff]
        %v231 = vld [vmem:[%s212 + $0x38] sm:$0xff]
        %v232 = vld [vmem:[%s212 + $0x40] sm:$0xff]
        %v233 = vld [vmem:[%s212 + $0x48] sm:$0xff]
        %v234 = vld [vmem:[%s212 + $0x50] sm:$0xff]
        %v235 = vld [vmem:[%s212 + $0x58] sm:$0xff]
        %v236 = vld [vmem:[%s212 + $0x60] sm:$0xff]
        %v237 = vld [vmem:[%s212 + $0x68] sm:$0xff]
        %v238 = vld [vmem:[%s212 + $0x70] sm:$0xff]
        %v239 = vld [vmem:[%s212 + $0x78] sm:$0xff]
        %v240 = vld [vmem:[%s212 + $0x80] sm:$0xff]
        %v241 = vld [vmem:[%s212 + $0x88] sm:$0xff]
        %v242 = vld [vmem:[%s212 + $0x90] sm:$0xff]
        %v243 = vld [vmem:[%s212 + $0x98] sm:$0xff]
        %v244 = vld [vmem:[%s212 + $0xa0] sm:$0xff]
        %v245 = vld [vmem:[%s212 + $0xa8] sm:$0xff]
        %v246 = vld [vmem:[%s212 + $0xb0] sm:$0xff]
        %v247 = vld [vmem:[%s212 + $0xb8] sm:$0xff]
        %v248 = vld [vmem:[%s212 + $0xc0] sm:$0xff]
        %v249 = vld [vmem:[%s212 + $0xc8] sm:$0xff]
        %v250 = vld [vmem:[%s212 + $0xd0] sm:$0xff]
        %v251 = vld [vmem:[%s212 + $0xd8] sm:$0xff]
        %v252 = vld [vmem:[%s212 + $0xe0] sm:$0xff]
        %v253 = vld [vmem:[%s212 + $0xe8] sm:$0xff]
        %v254 = vld [vmem:[%s212 + $0xf0] sm:$0xff]
        %v255 = vld [vmem:[%s212 + $0xf8] sm:$0xff]
        %v256 = vld [vmem:[%s217] sm:$0xf]
        %v257 = vld [vmem:[%s217 + $0x4] sm:$0xf]
        %v258 = vld [vmem:[%s217 + $0x8] sm:$0xf]
        %v259 = vld [vmem:[%s217 + $0xc] sm:$0xf]
        %v260 = vld [vmem:[%s217 + $0x10] sm:$0xf]
        %v261 = vld [vmem:[%s217 + $0x14] sm:$0xf]
        %v262 = vld [vmem:[%s217 + $0x18] sm:$0xf]
        %v263 = vld [vmem:[%s217 + $0x1c] sm:$0xf]
        %v264 = vld [vmem:[%s217 + $0x20] sm:$0xf]
        %v265 = vld [vmem:[%s217 + $0x24] sm:$0xf]
        %v266 = vld [vmem:[%s217 + $0x28] sm:$0xf]
        %v267 = vld [vmem:[%s217 + $0x2c] sm:$0xf]
        %v268 = vld [vmem:[%s217 + $0x30] sm:$0xf]
        %v269 = vld [vmem:[%s217 + $0x34] sm:$0xf]
        %v270 = vld [vmem:[%s217 + $0x38] sm:$0xf]
        %v271 = vld [vmem:[%s217 + $0x3c] sm:$0xf]
        %v272 = vld [vmem:[%s217 + $0x40] sm:$0xf]
        %v273 = vld [vmem:[%s217 + $0x44] sm:$0xf]
        %v274 = vld [vmem:[%s217 + $0x48] sm:$0x3]
        %v307 = vunpack.c.l.b16 %v224
        %v308 = vunpack.c.h.b16 %v224
        %v309 = vunpack.c.l.b16 %v225
        %v310 = vunpack.c.h.b16 %v225
        %v311 = vunpack.c.l.b16 %v226
        %v312 = vunpack.c.h.b16 %v226
        %v313 = vunpack.c.l.b16 %v227
        %v314 = vunpack.c.h.b16 %v227
        %v315 = vunpack.c.l.b16 %v228
        %v316 = vunpack.c.h.b16 %v228
        %v317 = vunpack.c.l.b16 %v229
        %v318 = vunpack.c.h.b16 %v229
        %v319 = vunpack.c.l.b16 %v230
        %v320 = vunpack.c.h.b16 %v230
        %v321 = vunpack.c.l.b16 %v231
        %v322 = vunpack.c.h.b16 %v231
        %v323 = vunpack.c.l.b16 %v232
        %v324 = vunpack.c.h.b16 %v232
        %v325 = vunpack.c.l.b16 %v233
        %v326 = vunpack.c.h.b16 %v233
        %v327 = vunpack.c.l.b16 %v234
        %v328 = vunpack.c.h.b16 %v234
        %v329 = vunpack.c.l.b16 %v235
        %v330 = vunpack.c.h.b16 %v235
        %v331 = vunpack.c.l.b16 %v236
        %v332 = vunpack.c.h.b16 %v236
        %v333 = vunpack.c.l.b16 %v237
        %v334 = vunpack.c.h.b16 %v237
        %v335 = vunpack.c.l.b16 %v238
        %v336 = vunpack.c.h.b16 %v238
        %v337 = vunpack.c.l.b16 %v239
        %v338 = vunpack.c.h.b16 %v239
        %v339 = vunpack.c.l.b16 %v240
        %v340 = vunpack.c.h.b16 %v240
        %v341 = vunpack.c.l.b16 %v241
        %v342 = vunpack.c.h.b16 %v241
        %v343 = vunpack.c.l.b16 %v242
        %v344 = vunpack.c.h.b16 %v242
        %v345 = vunpack.c.l.b16 %v243
        %v346 = vunpack.c.h.b16 %v243
        %v347 = vunpack.c.l.b16 %v244
        %v348 = vunpack.c.h.b16 %v244
        %v349 = vunpack.c.l.b16 %v245
        %v350 = vunpack.c.h.b16 %v245
        %v351 = vunpack.c.l.b16 %v246
        %v352 = vunpack.c.h.b16 %v246
        %v353 = vunpack.c.l.b16 %v247
        %v354 = vunpack.c.h.b16 %v247
        %v355 = vunpack.c.l.b16 %v248
        %v356 = vunpack.c.h.b16 %v248
        %v357 = vunpack.c.l.b16 %v249
        %v358 = vunpack.c.h.b16 %v249
        %v359 = vunpack.c.l.b16 %v250
        %v360 = vunpack.c.h.b16 %v250
        %v361 = vunpack.c.l.b16 %v251
        %v362 = vunpack.c.h.b16 %v251
        %v363 = vunpack.c.l.b16 %v252
        %v364 = vunpack.c.h.b16 %v252
        %v365 = vunpack.c.l.b16 %v253
        %v366 = vunpack.c.h.b16 %v253
        %v367 = vunpack.c.l.b16 %v254
        %v368 = vunpack.c.h.b16 %v254
        %v369 = vunpack.c.l.b16 %v255
        %v370 = vunpack.c.h.b16 %v255
        %v371 = vpack.c.b16 %v309, %v307
        %v372 = vpack.c.b16 %v310, %v308
        %v373 = vpack.c.b16 %v313, %v311
        %v374 = vpack.c.b16 %v314, %v312
        %v375 = vpack.c.b16 %v317, %v315
        %v376 = vpack.c.b16 %v318, %v316
        %v377 = vpack.c.b16 %v321, %v319
        %v378 = vpack.c.b16 %v322, %v320
        %v379 = vpack.c.b16 %v325, %v323
        %v380 = vpack.c.b16 %v326, %v324
        %v381 = vpack.c.b16 %v329, %v327
        %v382 = vpack.c.b16 %v330, %v328
        %v383 = vpack.c.b16 %v333, %v331
        %v384 = vpack.c.b16 %v334, %v332
        %v385 = vpack.c.b16 %v337, %v335
        %v386 = vpack.c.b16 %v338, %v336
        %v387 = vpack.c.b16 %v341, %v339
        %v388 = vpack.c.b16 %v342, %v340
        %v389 = vpack.c.b16 %v345, %v343
        %v390 = vpack.c.b16 %v346, %v344
        %v391 = vpack.c.b16 %v349, %v347
        %v392 = vpack.c.b16 %v350, %v348
        %v393 = vpack.c.b16 %v353, %v351
        %v394 = vpack.c.b16 %v354, %v352
        %v395 = vpack.c.b16 %v357, %v355
        %v396 = vpack.c.b16 %v358, %v356
        %v397 = vpack.c.b16 %v361, %v359
        %v398 = vpack.c.b16 %v362, %v360
        %v399 = vpack.c.b16 %v365, %v363
        %v400 = vpack.c.b16 %v366, %v364
        %v401 = vpack.c.b16 %v369, %v367
        %v402 = vpack.c.b16 %v370, %v368
        %v438 = vunpack.c.l.b16 %v256
        %v439 = vunpack.c.l.b16 %v257
        %v440 = vunpack.c.l.b16 %v258
        %v441 = vunpack.c.l.b16 %v259
        %v442 = vunpack.c.l.b16 %v260
        %v443 = vunpack.c.l.b16 %v261
        %v444 = vunpack.c.l.b16 %v262
        %v445 = vunpack.c.l.b16 %v263
        %v446 = vunpack.c.l.b16 %v264
        %v447 = vunpack.c.l.b16 %v265
        %v448 = vunpack.c.l.b16 %v266
        %v449 = vunpack.c.l.b16 %v267
        %v450 = vunpack.c.l.b16 %v268
        %v451 = vunpack.c.l.b16 %v269
        %v452 = vunpack.c.l.b16 %v270
        %v453 = vunpack.c.l.b16 %v271
        %v454 = vunpack.c.l.b16 %v272
        %v455 = vunpack.c.l.b16 %v273
        %v456 = vunpack.c.l.b16 %v274
        %v457 = vpack.c.b16 %v439, %v438
        %v458 = vpack.c.b16 %v441, %v440
        %v459 = vpack.c.b16 %v443, %v442
        %v460 = vpack.c.b16 %v445, %v444
        %v461 = vpack.c.b16 %v447, %v446
        %v462 = vpack.c.b16 %v449, %v448
        %v463 = vpack.c.b16 %v451, %v450
        %v464 = vpack.c.b16 %v453, %v452
        %v465 = vpack.c.b16 %v455, %v454
        %v466 = vpack.c.b16 %v456, %v456
        %vm476 = vcmask 154624
        %v478 = vsel %vm476, %v372, 0
        %v481 = vsel %vm476, %v374, 0
        %v484 = vsel %vm476, %v376, 0
        %v487 = vsel %vm476, %v378, 0
        %v490 = vsel %vm476, %v380, 0
        %v493 = vsel %vm476, %v382, 0
        %v496 = vsel %vm476, %v384, 0
        %v499 = vsel %vm476, %v386, 0
        %v502 = vsel %vm476, %v388, 0
        %v505 = vsel %vm476, %v390, 0
        %v508 = vsel %vm476, %v392, 0
        %v511 = vsel %vm476, %v394, 0
        %v514 = vsel %vm476, %v396, 0
        %v517 = vsel %vm476, %v398, 0
        %v520 = vsel %vm476, %v400, 0
        %v523 = vsel %vm476, %v402, 0
        %vm525 = vcmask 1040384
        %vm526 = vcmask 1041408
        %v527 = vsel %vm525, 4294967295, 65535
        %v528 = vsel %vm526, %v527, 0
        %v530 = vand.u32 %v466, %v528
        %532 = vmatprep.subr.bf16.mxu0 0
        %533 = vmatpush1.bf16.msra.mxu0 %v464
        %534 = vmatprep.subr.bf16.mxu0 0
        %535 = vmatpush1.bf16.msra.mxu0 %v463
        %536 = vmatprep.subr.bf16.mxu0 0
        %537 = vmatpush1.bf16.msra.mxu0 %v462
        %538 = vmatprep.subr.bf16.mxu0 0
        %539 = vmatpush1.bf16.msra.mxu0 %v461
        %540 = vmatprep.subr.bf16.mxu0 0
        %541 = vmatpush1.bf16.msra.mxu0 %v460
        %542 = vmatprep.subr.bf16.mxu0 0
        %543 = vmatpush1.bf16.msra.mxu0 %v459
        %544 = vmatprep.subr.bf16.mxu0 0
        %545 = vmatpush1.bf16.msra.mxu0 %v458
        %546 = vmatprep.subr.bf16.mxu0 0
        %547 = vmatpush1.bf16.msra.mxu0 %v457
        %548 = vmatprep.subr.bf16.mxu0 0
        %549 = vmatpush2.bf16.msra.mxu0 0
        %550 = vmatprep.subr.bf16.mxu0 0
        %551 = vmatpush2.bf16.msra.mxu0 0
        %552 = vmatprep.subr.bf16.mxu0 0
        %553 = vmatpush2.bf16.msra.mxu0 0
        %554 = vmatprep.subr.bf16.mxu0 0
        %555 = vmatpush2.bf16.msra.mxu0 0
        %556 = vmatprep.subr.bf16.mxu0 0
        %557 = vmatpush2.bf16.msra.mxu0 0
        %558 = vmatprep.subr.bf16.mxu0 0
        %559 = vmatpush2.bf16.msra.mxu0 0
        %560 = vmatprep.subr.bf16.mxu0 0
        %561 = vmatpush2.bf16.msra.mxu0 %v530
        %562 = vmatprep.subr.bf16.mxu0 0
        %563 = vmatpush2.bf16.msra.mxu0 %v465
        %564 = vmatprep.mubr.bf16.mxu0 %v478
        %565 = vmatmul.mubr.bf16.gmra.mxu0 %v371
        %v566 = vpop.f32.mrf.mxu0
        %v567 = vadd.f32 0.0, %v566
        %v568 = vpop.f32.mrf.mxu0
        %v569 = vpop.f32.mrf.mxu0
        %v570 = vadd.f32 0.0, %v569
        %v571 = vpop.f32.mrf.mxu0
        %572 = vmatprep.mubr.bf16.mxu0 %v481
        %573 = vmatmul.mubr.bf16.gmra.mxu0 %v373
        %v574 = vpop.f32.mrf.mxu0
        %v575 = vadd.f32 0.0, %v574
        %v576 = vpop.f32.mrf.mxu0
        %v577 = vpop.f32.mrf.mxu0
        %v578 = vadd.f32 0.0, %v577
        %v579 = vpop.f32.mrf.mxu0
        %580 = vmatprep.mubr.bf16.mxu0 %v484
        %581 = vmatmul.mubr.bf16.gmra.mxu0 %v375
        %v582 = vpop.f32.mrf.mxu0
        %v583 = vadd.f32 0.0, %v582
        %v584 = vpop.f32.mrf.mxu0
        %v585 = vpop.f32.mrf.mxu0
        %v586 = vadd.f32 0.0, %v585
        %v587 = vpop.f32.mrf.mxu0
        %588 = vmatprep.mubr.bf16.mxu0 %v487
        %589 = vmatmul.mubr.bf16.gmra.mxu0 %v377
        %v590 = vpop.f32.mrf.mxu0
        %v591 = vadd.f32 0.0, %v590
        %v592 = vpop.f32.mrf.mxu0
        %v593 = vpop.f32.mrf.mxu0
        %v594 = vadd.f32 0.0, %v593
        %v595 = vpop.f32.mrf.mxu0
        %596 = vmatprep.mubr.bf16.mxu0 %v490
        %597 = vmatmul.mubr.bf16.gmra.mxu0 %v379
        %v598 = vpop.f32.mrf.mxu0
        %v599 = vadd.f32 0.0, %v598
        %v600 = vpop.f32.mrf.mxu0
        %v601 = vpop.f32.mrf.mxu0
        %v602 = vadd.f32 0.0, %v601
        %v603 = vpop.f32.mrf.mxu0
        %604 = vmatprep.mubr.bf16.mxu0 %v493
        %605 = vmatmul.mubr.bf16.gmra.mxu0 %v381
        %v606 = vpop.f32.mrf.mxu0
        %v607 = vadd.f32 0.0, %v606
        %v608 = vpop.f32.mrf.mxu0
        %v609 = vpop.f32.mrf.mxu0
        %v610 = vadd.f32 0.0, %v609
        %v611 = vpop.f32.mrf.mxu0
        %612 = vmatprep.mubr.bf16.mxu0 %v496
        %613 = vmatmul.mubr.bf16.gmra.mxu0 %v383
        %v614 = vpop.f32.mrf.mxu0
        %v615 = vadd.f32 0.0, %v614
        %v616 = vpop.f32.mrf.mxu0
        %v617 = vpop.f32.mrf.mxu0
        %v618 = vadd.f32 0.0, %v617
        %v619 = vpop.f32.mrf.mxu0
        %620 = vmatprep.mubr.bf16.mxu0 %v499
        %621 = vmatmul.mubr.bf16.gmra.mxu0 %v385
        %v622 = vpop.f32.mrf.mxu0
        %v623 = vadd.f32 0.0, %v622
        %v624 = vpop.f32.mrf.mxu0
        %v625 = vpop.f32.mrf.mxu0
        %v626 = vadd.f32 0.0, %v625
        %v627 = vpop.f32.mrf.mxu0
        %628 = vmatprep.mubr.bf16.mxu0 %v502
        %629 = vmatmul.mubr.bf16.gmra.mxu0 %v387
        %v630 = vpop.f32.mrf.mxu0
        %v631 = vadd.f32 0.0, %v630
        %v632 = vpop.f32.mrf.mxu0
        %v633 = vpop.f32.mrf.mxu0
        %v634 = vadd.f32 0.0, %v633
        %v635 = vpop.f32.mrf.mxu0
        %636 = vmatprep.mubr.bf16.mxu0 %v505
        %637 = vmatmul.mubr.bf16.gmra.mxu0 %v389
        %v638 = vpop.f32.mrf.mxu0
        %v639 = vadd.f32 0.0, %v638
        %v640 = vpop.f32.mrf.mxu0
        %v641 = vpop.f32.mrf.mxu0
        %v642 = vadd.f32 0.0, %v641
        %v643 = vpop.f32.mrf.mxu0
        %644 = vmatprep.mubr.bf16.mxu0 %v508
        %645 = vmatmul.mubr.bf16.gmra.mxu0 %v391
        %v646 = vpop.f32.mrf.mxu0
        %v647 = vadd.f32 0.0, %v646
        %v648 = vpop.f32.mrf.mxu0
        %v649 = vpop.f32.mrf.mxu0
        %v650 = vadd.f32 0.0, %v649
        %v651 = vpop.f32.mrf.mxu0
        %652 = vmatprep.mubr.bf16.mxu0 %v511
        %653 = vmatmul.mubr.bf16.gmra.mxu0 %v393
        %v654 = vpop.f32.mrf.mxu0
        %v655 = vadd.f32 0.0, %v654
        %v656 = vpop.f32.mrf.mxu0
        %v657 = vpop.f32.mrf.mxu0
        %v658 = vadd.f32 0.0, %v657
        %v659 = vpop.f32.mrf.mxu0
        %660 = vmatprep.mubr.bf16.mxu0 %v514
        %661 = vmatmul.mubr.bf16.gmra.mxu0 %v395
        %v662 = vpop.f32.mrf.mxu0
        %v663 = vadd.f32 0.0, %v662
        %v664 = vpop.f32.mrf.mxu0
        %v665 = vpop.f32.mrf.mxu0
        %v666 = vadd.f32 0.0, %v665
        %v667 = vpop.f32.mrf.mxu0
        %668 = vmatprep.mubr.bf16.mxu0 %v517
        %669 = vmatmul.mubr.bf16.gmra.mxu0 %v397
        %v670 = vpop.f32.mrf.mxu0
        %v671 = vadd.f32 0.0, %v670
        %v672 = vpop.f32.mrf.mxu0
        %v673 = vpop.f32.mrf.mxu0
        %v674 = vadd.f32 0.0, %v673
        %v675 = vpop.f32.mrf.mxu0
        %676 = vmatprep.mubr.bf16.mxu0 %v520
        %677 = vmatmul.mubr.bf16.gmra.mxu0 %v399
        %v678 = vpop.f32.mrf.mxu0
        %v679 = vadd.f32 0.0, %v678
        %v680 = vpop.f32.mrf.mxu0
        %v681 = vpop.f32.mrf.mxu0
        %v682 = vadd.f32 0.0, %v681
        %v683 = vpop.f32.mrf.mxu0
        %684 = vmatprep.mubr.bf16.mxu0 %v523
        %685 = vmatmul.mubr.bf16.gmra.mxu0 %v401
        %v686 = vpop.f32.mrf.mxu0
        %v687 = vadd.f32 0.0, %v686
        %v688 = vpop.f32.mrf.mxu0
        %v689 = vpop.f32.mrf.mxu0
        %v690 = vadd.f32 0.0, %v689
        %v691 = vpop.f32.mrf.mxu0
        %692 = vdwg.mxu0
        %v693 = vld [vmem:[%s221] sm:$0x1]
        %v694 = vlaneseq
        %v695 = vshrl.u32 %v694, 7
        %v696 = vsub.s32 0, %v695
        %v697 = vrot.slane %v693, %v696
        %v698 = vmul.f32 %v567, %v697
        %v699 = vmul.f32 %v570, %v697
        %v700 = vmul.f32 %v575, %v697
        %v701 = vmul.f32 %v578, %v697
        %v702 = vmul.f32 %v583, %v697
        %v703 = vmul.f32 %v586, %v697
        %v704 = vmul.f32 %v591, %v697
        %v705 = vmul.f32 %v594, %v697
        %v706 = vmul.f32 %v599, %v697
        %v707 = vmul.f32 %v602, %v697
        %v708 = vmul.f32 %v607, %v697
        %v709 = vmul.f32 %v610, %v697
        %v710 = vmul.f32 %v615, %v697
        %v711 = vmul.f32 %v618, %v697
        %v712 = vmul.f32 %v623, %v697
        %v713 = vmul.f32 %v626, %v697
        %v714 = vmul.f32 %v631, %v697
        %v715 = vmul.f32 %v634, %v697
        %v716 = vmul.f32 %v639, %v697
        %v717 = vmul.f32 %v642, %v697
        %v718 = vmul.f32 %v647, %v697
        %v719 = vmul.f32 %v650, %v697
        %v720 = vmul.f32 %v655, %v697
        %v721 = vmul.f32 %v658, %v697
        %v722 = vmul.f32 %v663, %v697
        %v723 = vmul.f32 %v666, %v697
        %v724 = vmul.f32 %v671, %v697
        %v725 = vmul.f32 %v674, %v697
        %v726 = vmul.f32 %v679, %v697
        %v727 = vmul.f32 %v682, %v697
        %v728 = vmul.f32 %v687, %v697
        %v729 = vmul.f32 %v690, %v697
        %v730 = vld [vmem:[%s221 + $0x1] sm:$0x1]
        %v731 = vlaneseq
        %v732 = vshrl.u32 %v731, 7
        %v733 = vsub.s32 0, %v732
        %v734 = vrot.slane %v730, %v733
        %v735 = vadd.f32 %v698, %v734
        %v736 = vadd.f32 %v699, %v734
        %v737 = vadd.f32 %v700, %v734
        %v738 = vadd.f32 %v701, %v734
        %v739 = vadd.f32 %v702, %v734
        %v740 = vadd.f32 %v703, %v734
        %v741 = vadd.f32 %v704, %v734
        %v742 = vadd.f32 %v705, %v734
        %v743 = vadd.f32 %v706, %v734
        %v744 = vadd.f32 %v707, %v734
        %v745 = vadd.f32 %v708, %v734
        %v746 = vadd.f32 %v709, %v734
        %v747 = vadd.f32 %v710, %v734
        %v748 = vadd.f32 %v711, %v734
        %v749 = vadd.f32 %v712, %v734
        %v750 = vadd.f32 %v713, %v734
        %v751 = vadd.f32 %v714, %v734
        %v752 = vadd.f32 %v715, %v734
        %v753 = vadd.f32 %v716, %v734
        %v754 = vadd.f32 %v717, %v734
        %v755 = vadd.f32 %v718, %v734
        %v756 = vadd.f32 %v719, %v734
        %v757 = vadd.f32 %v720, %v734
        %v758 = vadd.f32 %v721, %v734
        %v759 = vadd.f32 %v722, %v734
        %v760 = vadd.f32 %v723, %v734
        %v761 = vadd.f32 %v724, %v734
        %v762 = vadd.f32 %v725, %v734
        %v763 = vadd.f32 %v726, %v734
        %v764 = vadd.f32 %v727, %v734
        %v765 = vadd.f32 %v728, %v734
        %v766 = vadd.f32 %v729, %v734
        %v767 = vmax.f32 %v735, 0.0
        %v768 = vmax.f32 %v736, 0.0
        %v769 = vmax.f32 %v737, 0.0
        %v770 = vmax.f32 %v738, 0.0
        %v771 = vmax.f32 %v739, 0.0
        %v772 = vmax.f32 %v740, 0.0
        %v773 = vmax.f32 %v741, 0.0
        %v774 = vmax.f32 %v742, 0.0
        %v775 = vmax.f32 %v743, 0.0
        %v776 = vmax.f32 %v744, 0.0
        %v777 = vmax.f32 %v745, 0.0
        %v778 = vmax.f32 %v746, 0.0
        %v779 = vmax.f32 %v747, 0.0
        %v780 = vmax.f32 %v748, 0.0
        %v781 = vmax.f32 %v749, 0.0
        %v782 = vmax.f32 %v750, 0.0
        %v783 = vmax.f32 %v751, 0.0
        %v784 = vmax.f32 %v752, 0.0
        %v785 = vmax.f32 %v753, 0.0
        %v786 = vmax.f32 %v754, 0.0
        %v787 = vmax.f32 %v755, 0.0
        %v788 = vmax.f32 %v756, 0.0
        %v789 = vmax.f32 %v757, 0.0
        %v790 = vmax.f32 %v758, 0.0
        %v791 = vmax.f32 %v759, 0.0
        %v792 = vmax.f32 %v760, 0.0
        %v793 = vmax.f32 %v761, 0.0
        %v794 = vmax.f32 %v762, 0.0
        %v795 = vmax.f32 %v763, 0.0
        %v796 = vmax.f32 %v764, 0.0
        %v797 = vmax.f32 %v765, 0.0
        %v798 = vmax.f32 %v766, 0.0
        %v799 = vpack.c.bf16 %v768, %v767
        %v800 = vpack.c.bf16 %v770, %v769
        %v801 = vpack.c.bf16 %v772, %v771
        %v802 = vpack.c.bf16 %v774, %v773
        %v803 = vpack.c.bf16 %v776, %v775
        %v804 = vpack.c.bf16 %v778, %v777
        %v805 = vpack.c.bf16 %v780, %v779
        %v806 = vpack.c.bf16 %v782, %v781
        %v807 = vpack.c.bf16 %v784, %v783
        %v808 = vpack.c.bf16 %v786, %v785
        %v809 = vpack.c.bf16 %v788, %v787
        %v810 = vpack.c.bf16 %v790, %v789
        %v811 = vpack.c.bf16 %v792, %v791
        %v812 = vpack.c.bf16 %v794, %v793
        %v813 = vpack.c.bf16 %v796, %v795
        %v814 = vpack.c.bf16 %v798, %v797
        %v831 = vunpack.c.l.b16 %v799
        %v832 = vunpack.c.h.b16 %v799
        %v833 = vunpack.c.l.b16 %v800
        %v834 = vunpack.c.h.b16 %v800
        %v835 = vunpack.c.l.b16 %v801
        %v836 = vunpack.c.h.b16 %v801
        %v837 = vunpack.c.l.b16 %v802
        %v838 = vunpack.c.h.b16 %v802
        %v839 = vunpack.c.l.b16 %v803
        %v840 = vunpack.c.h.b16 %v803
        %v841 = vunpack.c.l.b16 %v804
        %v842 = vunpack.c.h.b16 %v804
        %v843 = vunpack.c.l.b16 %v805
        %v844 = vunpack.c.h.b16 %v805
        %v845 = vunpack.c.l.b16 %v806
        %v846 = vunpack.c.h.b16 %v806
        %v847 = vunpack.c.l.b16 %v807
        %v848 = vunpack.c.h.b16 %v807
        %v849 = vunpack.c.l.b16 %v808
        %v850 = vunpack.c.h.b16 %v808
        %v851 = vunpack.c.l.b16 %v809
        %v852 = vunpack.c.h.b16 %v809
        %v853 = vunpack.c.l.b16 %v810
        %v854 = vunpack.c.h.b16 %v810
        %v855 = vunpack.c.l.b16 %v811
        %v856 = vunpack.c.h.b16 %v811
        %v857 = vunpack.c.l.b16 %v812
        %v858 = vunpack.c.h.b16 %v812
        %v859 = vunpack.c.l.b16 %v813
        %v860 = vunpack.c.h.b16 %v813
        %v861 = vunpack.c.l.b16 %v814
        %v862 = vunpack.c.h.b16 %v814
        %v863 = vpack.c.b16 %v831, %v831
        %v864 = vpack.c.b16 %v832, %v832
        %v865 = vpack.c.b16 %v833, %v833
        %v866 = vpack.c.b16 %v834, %v834
        %v867 = vpack.c.b16 %v835, %v835
        %v868 = vpack.c.b16 %v836, %v836
        %v869 = vpack.c.b16 %v837, %v837
        %v870 = vpack.c.b16 %v838, %v838
        %v871 = vpack.c.b16 %v839, %v839
        %v872 = vpack.c.b16 %v840, %v840
        %v873 = vpack.c.b16 %v841, %v841
        %v874 = vpack.c.b16 %v842, %v842
        %v875 = vpack.c.b16 %v843, %v843
        %v876 = vpack.c.b16 %v844, %v844
        %v877 = vpack.c.b16 %v845, %v845
        %v878 = vpack.c.b16 %v846, %v846
        %v879 = vpack.c.b16 %v847, %v847
        %v880 = vpack.c.b16 %v848, %v848
        %v881 = vpack.c.b16 %v849, %v849
        %v882 = vpack.c.b16 %v850, %v850
        %v883 = vpack.c.b16 %v851, %v851
        %v884 = vpack.c.b16 %v852, %v852
        %v885 = vpack.c.b16 %v853, %v853
        %v886 = vpack.c.b16 %v854, %v854
        %v887 = vpack.c.b16 %v855, %v855
        %v888 = vpack.c.b16 %v856, %v856
        %v889 = vpack.c.b16 %v857, %v857
        %v890 = vpack.c.b16 %v858, %v858
        %v891 = vpack.c.b16 %v859, %v859
        %v892 = vpack.c.b16 %v860, %v860
        %v893 = vpack.c.b16 %v861, %v861
        %v894 = vpack.c.b16 %v862, %v862
        %927 = vst [vmem:[%s206] sm:$0xf] %v863
        %928 = vst [vmem:[%s206 + $0x4] sm:$0xf] %v864
        %929 = vst [vmem:[%s206 + $0x8] sm:$0xf] %v865
        %930 = vst [vmem:[%s206 + $0xc] sm:$0xf] %v866
        %931 = vst [vmem:[%s206 + $0x10] sm:$0xf] %v867
        %932 = vst [vmem:[%s206 + $0x14] sm:$0xf] %v868
        %933 = vst [vmem:[%s206 + $0x18] sm:$0xf] %v869
        %934 = vst [vmem:[%s206 + $0x1c] sm:$0xf] %v870
        %935 = vst [vmem:[%s206 + $0x20] sm:$0xf] %v871
        %936 = vst [vmem:[%s206 + $0x24] sm:$0xf] %v872
        %937 = vst [vmem:[%s206 + $0x28] sm:$0xf] %v873
        %938 = vst [vmem:[%s206 + $0x2c] sm:$0xf] %v874
        %939 = vst [vmem:[%s206 + $0x30] sm:$0xf] %v875
        %940 = vst [vmem:[%s206 + $0x34] sm:$0xf] %v876
        %941 = vst [vmem:[%s206 + $0x38] sm:$0xf] %v877
        %942 = vst [vmem:[%s206 + $0x3c] sm:$0xf] %v878
        %943 = vst [vmem:[%s206 + $0x40] sm:$0xf] %v879
        %944 = vst [vmem:[%s206 + $0x44] sm:$0xf] %v880
        %945 = vst [vmem:[%s206 + $0x48] sm:$0xf] %v881
        %946 = vst [vmem:[%s206 + $0x4c] sm:$0xf] %v882
        %947 = vst [vmem:[%s206 + $0x50] sm:$0xf] %v883
        %948 = vst [vmem:[%s206 + $0x54] sm:$0xf] %v884
        %949 = vst [vmem:[%s206 + $0x58] sm:$0xf] %v885
        %950 = vst [vmem:[%s206 + $0x5c] sm:$0xf] %v886
        %951 = vst [vmem:[%s206 + $0x60] sm:$0xf] %v887
        %952 = vst [vmem:[%s206 + $0x64] sm:$0xf] %v888
        %953 = vst [vmem:[%s206 + $0x68] sm:$0xf] %v889
        %954 = vst [vmem:[%s206 + $0x6c] sm:$0xf] %v890
        %955 = vst [vmem:[%s206 + $0x70] sm:$0xf] %v891
        %956 = vst [vmem:[%s206 + $0x74] sm:$0xf] %v892
        %957 = vst [vmem:[%s206 + $0x78] sm:$0xf] %v893
        %958 = vst [vmem:[%s206 + $0x7c] sm:$0xf] %v894
        %s959 = sand.u32 %s117, 1
        %s960 = scalar_lea.sflag [#allocation3], %s959
        %s961 = sand.u32 %s117, 1
        %s962 = smul.addr %s961, 128
        %s963 = scalar_lea.vmem [#allocation2], %s962
        // Predicated region
        $region33: #{tpu_custom_call.1} parent=31 // pred_check
          %p964 = pneg %p127
        $region34: #{tpu_custom_call.1} parent=31 // pred_check_branch
          %966 = sbr.rel (%p964) target = $region36
        $region35: #{tpu_custom_call.1} parent=31 // pred_region
          %s967 = smul.u32 32, %s21
          %s969 = ssub.s32 2048, 2048
          %970 = vsyncadd %s960, %s969
          %s971 = sadd.s32 %s22, %s967
          %s972 = smul.addr %s971, 64
          %s973 = scalar_lea.hbm %s3, %s972
          %s974 = sshll.u32 %s963, 4
          %s975 = int_to_ptr.vmem [resolvable:$true] %s974
          %980 = dma.vmem_to_hbm [thread:$0]  %s975, 2048, %s973, %s960, 64, 64, 4
        $region36: #{tpu_custom_call.1} parent=31 // pred_fallthru
          _
      $region32: #{tpu_custom_call.1} parent=5 // pred_fallthru
        _
      %p981 = scmp.le.s32.totalorder 2, %s12
      // Predicated region
      $region37: #{tpu_custom_call.1} parent=5 // pred_check
        %p982 = pneg %p981
      $region38: #{tpu_custom_call.1} parent=5 // pred_check_branch
        %984 = sbr.rel (%p982) target = $region40
      $region39: #{tpu_custom_call.1} parent=5 // pred_region
        %s985 = ssub.s32 %s12, 2
        // Predicated region
        $region41: #{tpu_custom_call.1} parent=39 // pred_check
          %p986 = pneg %p133
        $region42: #{tpu_custom_call.1} parent=39 // pred_check_branch
          %988 = sbr.rel (%p986) target = $region44
        $region43: #{tpu_custom_call.1} parent=39 // pred_region
          %s989 = sand.u32 %s118, 1
          %s990 = scalar_lea.sflag [#allocation3], %s989
          %s991 = sand.u32 %s118, 1
          %s992 = smul.addr %s991, 128
          %s993 = scalar_lea.vmem [#allocation2], %s992
          %994 = dma.done %s990, 2048
        $region44: #{tpu_custom_call.1} parent=39 // pred_fallthru
          _
      $region40: #{tpu_custom_call.1} parent=5 // pred_fallthru
        _
    $region6: #{tpu_custom_call.1} parent=1 // loop_footer
      %s16 = sadd.s32 1, %s12
    $region7: #{tpu_custom_call.1} parent=1 // loop_footer_branch
      %11 = sbr.rel target = $region3
    $region8: #{tpu_custom_call.1} parent=1 // loop_exit
      _
    %995 = vsyncpa [#allocation3], 1
    %s996 = scalar_lea.sflag [#allocation3], 1
    %997 = vsyncpa %s996, 1

</llo_original>
